<compile_context>
chip_gen: v7x
topology: tpu7x:2x2x1
jax: 0.10.0
libtpu: 0.0.40
codegen_flags: <defaults>
</compile_context>

<pallas_src>
import functools

import jax
import jax.numpy as jnp
from jax import lax
from jax.experimental import pallas as pl
from jax.experimental.pallas import tpu as pltpu

_LANES = 128


def _round_up(a, b):
    return (a + b - 1) // b * b


def _sublane_multiple(dtype):
    # 8 for 32-bit, 16 for bf16/f16, 32 for (u)int8/bool.
    return max(8, 32 // max(1, jnp.dtype(dtype).itemsize))


def _tpu_topology():
    """Return (tensorcores_per_chip, vmem_limit_bytes); conservative fallback."""
    try:
        kind = jax.devices()[0].device_kind.lower()
    except Exception:
        return 1, 64 * 1024 * 1024
    if "v7" in kind or "7x" in kind:
        return 2, 32 * 1024 * 1024      # v7x: 2 TCs/chip, 64 MiB VMEM per TC
    return 1, 64 * 1024 * 1024           # v5e / v6e: 1 TC, 128 MiB VMEM


def _bce_dice_kernel(x_ref, t_ref, acc_ref, *, r, k_tiles, rows_total,
                     covers_exactly):
    p = pl.program_id(0)   # parallel chunk (v7x dual-TC split)
    k = pl.program_id(1)   # reduction tile within the chunk

    @pl.when(k == 0)
    def _init():
        acc_ref[...] = jnp.zeros_like(acc_ref)

    x = x_ref[...].astype(jnp.float32)   # (N, r, 128)
    t = t_ref[...].astype(jnp.float32)

    def accumulate(mask=None):
        # Fused transcendentals: one exp + one log1p + one approx-recip/elem.
        e = jnp.exp(-jnp.abs(x))                                  # EUP
        bce = jnp.maximum(x, 0.0) - x * t + jnp.log1p(e)          # stable BCE
        d = 1.0 + e
        inv = pl.reciprocal(d, approx=True)                       # EUP slot
        inv = inv * (2.0 - d * inv)        # 1 Newton step -> ~1e-7 rel error
        sig = jnp.where(x >= 0.0, 1.0, e) * inv
        tt = t
        if mask is not None:               # boundary tile only
            bce = jnp.where(mask, bce, 0.0)
            sig = jnp.where(mask, sig, 0.0)
            tt = jnp.where(mask, tt, 0.0)
        # Reduce over the row/sublane axis only; cross-lane combine is done
        # once outside the kernel.
        acc_ref[0, 0] += jnp.sum(bce, axis=1)       # BCE partial sums
        acc_ref[0, 1] += jnp.sum(sig * tt, axis=1)  # intersection
        acc_ref[0, 2] += jnp.sum(sig, axis=1)       # sigmoid sums
        acc_ref[0, 3] += jnp.sum(tt, axis=1)        # target sums

    if covers_exactly:
        # Grid covers every row exactly -> never any masking.
        accumulate()
    else:
        rows_valid = rows_total - (p * k_tiles + k) * r

        @pl.when(rows_valid >= r)          # interior tile: mask-free fast path
        def _interior():
            accumulate()

        @pl.when(rows_valid < r)           # last partial / phantom tile only
        def _boundary():
            row_idx = lax.broadcasted_iota(jnp.int32, x.shape, 1)
            accumulate(mask=row_idx < rows_valid)


def bce_dice_loss(inp, target, *, input_block_budget_bytes=8 * 1024 * 1024):
    """inp, target: (N, C, H, W) arrays (any float/int dtype). Returns f32 scalar."""
    n = inp.shape[0]
    d_true = 1
    for s in inp.shape[1:]:
        d_true *= int(s)

    x2 = inp.reshape(n, d_true)
    t2 = target.reshape(n, d_true)

    num_tc, vmem_limit = _tpu_topology()
    sub = max(_sublane_multiple(x2.dtype), _sublane_multiple(t2.dtype))

    # Rows of 128 lanes. Pad the lane tail ONLY when D % 128 != 0 (or the input
    # is tiny) and use neutral values: logits -> -1e4, targets -> 0, so padded
    # elements contribute exactly 0 to all four sums and need no in-kernel mask.
    rows = max(pl.cdiv(d_true, _LANES), sub)
    d_lane = rows * _LANES
    if d_lane != d_true:
        pad = d_lane - d_true
        x2 = jnp.pad(x2, ((0, 0), (0, pad)),
                     constant_values=jnp.asarray(-1e4, x2.dtype))
        t2 = jnp.pad(t2, ((0, 0), (0, pad)),
                     constant_values=jnp.asarray(0, t2.dtype))
    x3 = x2.reshape(n, rows, _LANES)
    t3 = t2.reshape(n, rows, _LANES)

    # Row-tile size: multiple of the sublane packing, capped by
    #  (a) ~8 MiB combined input block (past the ~85% HBM-roofline knee and
    #      well inside every generation's VMEM once double-buffered),
    #  (b) enough tiles for pipeline overlap / dual-TC split,
    #  (c) the (rounded-down) row count so a block never exceeds the array.
    bytes_per_row = n * _LANES * (x3.dtype.itemsize + t3.dtype.itemsize)
    r_mem = max(sub, input_block_budget_bytes // bytes_per_row // sub * sub)

    p_chunks = 2 if (num_tc >= 2 and rows >= 2 * sub) else 1
    r_tiles = _round_up(pl.cdiv(rows, 4 * p_chunks), sub)
    r_full = max(sub, rows // sub * sub)
    r = int(min(r_mem, r_tiles, r_full))

    total_tiles = pl.cdiv(rows, r)
    if p_chunks > total_tiles:
        p_chunks = 1
    k_tiles = pl.cdiv(total_tiles, p_chunks)
    covers_exactly = (p_chunks * k_tiles * r == rows)
    has_phantom = (p_chunks * k_tiles > total_tiles)

    if has_phantom:
        # Clamp the block index for the (fully masked) phantom tile so the DMA
        # always stays in bounds; the in-kernel row mask zeroes its contribution.
        last = total_tiles - 1
        row_map = lambda p, k: (0, jnp.minimum(p * k_tiles + k, last), 0)
    else:
        row_map = lambda p, k: (0, p * k_tiles + k, 0)

    kernel = functools.partial(
        _bce_dice_kernel, r=r, k_tiles=k_tiles, rows_total=rows,
        covers_exactly=covers_exactly)

    partials = pl.pallas_call(
        kernel,
        out_shape=jax.ShapeDtypeStruct((p_chunks, 4, n, _LANES), jnp.float32),
        grid_spec=pltpu.PrefetchScalarGridSpec(
            num_scalar_prefetch=0,
            grid=(p_chunks, k_tiles),
            in_specs=[
                pl.BlockSpec((n, r, _LANES), row_map),
                pl.BlockSpec((n, r, _LANES), row_map),
            ],
            out_specs=pl.BlockSpec((1, 4, n, _LANES),
                                   lambda p, k: (p, 0, 0, 0)),
        ),
        compiler_params=pltpu.CompilerParams(
            dimension_semantics=("parallel", "arbitrary"),
            vmem_limit_bytes=vmem_limit,
        ),
    )(x3, t3)

    # Tiny final combine in plain JAX: sum over parallel chunks and lanes.
    sums = jnp.sum(partials, axis=(0, 3))                 # (4, N)
    bce_mean = jnp.sum(sums[0]) / jnp.float32(n * d_true)
    dice = (2.0 * sums[1] + 1e-8) / (sums[2] + sums[3] + 1e-8)
    dice_loss = 1.0 - jnp.sum(dice) / jnp.float32(n)
    return 0.5 * bce_mean + dice_loss


def _reference(inp, target):
    x = inp.astype(jnp.float32)
    t = target.astype(jnp.float32)
    bce = jnp.mean(jnp.maximum(x, 0.0) - x * t + jnp.log1p(jnp.exp(-jnp.abs(x))))
    sig = jax.nn.sigmoid(x)
    n = x.shape[0]
    s = sig.reshape(n, -1)
    tt = t.reshape(n, -1)
    inter = jnp.sum(s * tt, axis=1)
    dice = (2.0 * inter + 1e-8) / (jnp.sum(s, axis=1) + jnp.sum(tt, axis=1) + 1e-8)
    dice = 1.0 - jnp.sum(dice) / n
    return 0.5 * bce + dice


if __name__ == "__main__":
    key = jax.random.PRNGKey(0)
    k1, k2, k3, k4, k5, k6 = jax.random.split(key, 6)

    # NCHW logits and binary targets (shape implied by the module's usage).
    x = jax.random.normal(k1, (2, 4, 16, 16), dtype=jnp.float32)
    t = jax.random.bernoulli(k2, p=0.3, shape=(2, 4, 16, 16)).astype(jnp.float32)
    loss = jax.block_until_ready(bce_dice_loss(x, t))
    ref = jax.block_until_ready(_reference(x, t))
    assert jnp.allclose(loss, ref, rtol=1e-5, atol=1e-5), (loss, ref)

    # Ragged feature size (exercises the neutral-value lane-pad path).
    x2 = jax.random.normal(k3, (2, 3, 10, 10), dtype=jnp.float32)
    t2 = jax.random.bernoulli(k4, p=0.4, shape=(2, 3, 10, 10)).astype(jnp.float32)
    loss2 = jax.block_until_ready(bce_dice_loss(x2, t2))
    ref2 = jax.block_until_ready(_reference(x2, t2))
    assert jnp.allclose(loss2, ref2, rtol=1e-5, atol=1e-5), (loss2, ref2)

    # Multi-tile grid with a partial boundary tile (exercises the pl.when
    # fast-path / masked-boundary split and lane padding together).
    x3 = jax.random.normal(k5, (2, 5, 40, 40), dtype=jnp.float32)
    t3 = jax.random.bernoulli(k6, p=0.5, shape=(2, 5, 40, 40)).astype(jnp.float32)
    loss3 = jax.block_until_ready(bce_dice_loss(x3, t3))
    ref3 = jax.block_until_ready(_reference(x3, t3))
    assert jnp.allclose(loss3, ref3, rtol=1e-5, atol=1e-5), (loss3, ref3)

    print("KERNEL_OK")
</pallas_src>

<mosaic_0001>
module attributes {stable_mosaic.version = 11 : i64} {
  func.func @_bce_dice_kernel(%arg0: i32, %arg1: i32, %arg2: memref<2x8x128xf32, #tpu.memory_space<vmem>>, %arg3: memref<2x8x128xf32, #tpu.memory_space<vmem>>, %arg4: memref<1x4x2x128xf32, #tpu.memory_space<vmem>>) attributes {dimension_semantics = [#tpu.dimension_semantics<parallel>, #tpu.dimension_semantics<arbitrary>], iteration_bounds = array<i64: 1, 1>, scalar_prefetch = 0 : i64, scratch_operands = 0 : i64, tpu.core_type = #tpu.core_type<tc>, window_params = [{transform_indices = @transform_0, window_bounds = array<i64: 2, 8, 128>}, {transform_indices = @transform_1, window_bounds = array<i64: 2, 8, 128>}, {transform_indices = @transform_2, window_bounds = array<i64: 1, 4, 2, 128>}]} {
    %c0_i32 = arith.constant 0 : i32
    %0 = arith.cmpi eq, %arg1, %c0_i32 : i32
    %1 = arith.extui %0 : i1 to i32
    %c0_i32_0 = arith.constant 0 : i32
    %2 = arith.cmpi ne, %1, %c0_i32_0 : i32
    scf.if %2 {
      %cst_44 = arith.constant 0.000000e+00 : f32
      %56 = vector.broadcast %cst_44 : f32 to vector<1x4x2x128xf32>
      %c0_45 = arith.constant 0 : index
      %c0_46 = arith.constant 0 : index
      %c0_47 = arith.constant 0 : index
      %c0_48 = arith.constant 0 : index
      %57 = vector.load %arg4[%c0_45, %c0_46, %c0_47, %c0_48] : memref<1x4x2x128xf32, #tpu.memory_space<vmem>>, vector<1x4x2x128xf32>
      tpu.vector_store %arg4[%c0_45, %c0_46, %c0_47, %c0_48], %56 {strides = array<i32>} : memref<1x4x2x128xf32, #tpu.memory_space<vmem>>, vector<1x4x2x128xf32>,
    } else {
    }
    %c0 = arith.constant 0 : index
    %c0_1 = arith.constant 0 : index
    %c0_2 = arith.constant 0 : index
    %3 = vector.load %arg2[%c0, %c0_1, %c0_2] : memref<2x8x128xf32, #tpu.memory_space<vmem>>, vector<2x8x128xf32>
    %c0_3 = arith.constant 0 : index
    %c0_4 = arith.constant 0 : index
    %c0_5 = arith.constant 0 : index
    %4 = vector.load %arg3[%c0_3, %c0_4, %c0_5] : memref<2x8x128xf32, #tpu.memory_space<vmem>>, vector<2x8x128xf32>
    %5 = math.absf %3 : vector<2x8x128xf32>
    %cst = arith.constant 0.000000e+00 : f32
    %6 = vector.broadcast %cst : f32 to vector<2x8x128xf32>
    %7 = arith.subf %6, %5 : vector<2x8x128xf32>
    %8 = math.exp %7 : vector<2x8x128xf32>
    %cst_6 = arith.constant 0.000000e+00 : f32
    %9 = vector.broadcast %cst_6 : f32 to vector<2x8x128xf32>
    %10 = arith.maximumf %3, %9 : vector<2x8x128xf32>
    %11 = arith.mulf %3, %4 : vector<2x8x128xf32>
    %12 = arith.subf %10, %11 : vector<2x8x128xf32>
    %13 = math.log1p %8 : vector<2x8x128xf32>
    %14 = arith.addf %12, %13 : vector<2x8x128xf32>
    %cst_7 = arith.constant 1.000000e+00 : f32
    %15 = vector.broadcast %cst_7 : f32 to vector<2x8x128xf32>
    %16 = arith.addf %15, %8 : vector<2x8x128xf32>
    %17 = tpu.reciprocal %16 {approx = true} : vector<2x8x128xf32> -> vector<2x8x128xf32>
    %18 = arith.mulf %16, %17 : vector<2x8x128xf32>
    %cst_8 = arith.constant 2.000000e+00 : f32
    %19 = vector.broadcast %cst_8 : f32 to vector<2x8x128xf32>
    %20 = arith.subf %19, %18 : vector<2x8x128xf32>
    %21 = arith.mulf %17, %20 : vector<2x8x128xf32>
    %cst_9 = arith.constant 0.000000e+00 : f32
    %22 = vector.broadcast %cst_9 : f32 to vector<2x8x128xf32>
    %23 = arith.cmpf oge, %3, %22 : vector<2x8x128xf32>
    %cst_10 = arith.constant 1.000000e+00 : f32
    %24 = vector.broadcast %cst_10 : f32 to vector<2x8x128xf32>
    %25 = arith.select %23, %24, %8 : vector<2x8x128xi1>, vector<2x8x128xf32>
    %26 = arith.mulf %25, %21 : vector<2x8x128xf32>
    %c0_11 = arith.constant 0 : index
    %c0_12 = arith.constant 0 : index
    %c0_13 = arith.constant 0 : index
    %c0_14 = arith.constant 0 : index
    %27 = vector.load %arg4[%c0_11, %c0_12, %c0_13, %c0_14] : memref<1x4x2x128xf32, #tpu.memory_space<vmem>>, vector<1x1x2x128xf32>
    %28 = vector.shape_cast %27 : vector<1x1x2x128xf32> to vector<2x128xf32>
    %cst_15 = arith.constant dense<0.000000e+00> : vector<2x128xf32>
    %29 = vector.multi_reduction <add>, %14, %cst_15 [1] : vector<2x8x128xf32> to vector<2x128xf32>
    %30 = arith.addf %28, %29 : vector<2x128xf32>
    %c0_16 = arith.constant 0 : index
    %c0_17 = arith.constant 0 : index
    %c0_18 = arith.constant 0 : index
    %c0_19 = arith.constant 0 : index
    %31 = vector.load %arg4[%c0_16, %c0_17, %c0_18, %c0_19] : memref<1x4x2x128xf32, #tpu.memory_space<vmem>>, vector<1x1x2x128xf32>
    %32 = vector.shape_cast %31 : vector<1x1x2x128xf32> to vector<2x128xf32>
    %33 = vector.shape_cast %30 : vector<2x128xf32> to vector<1x1x2x128xf32>
    tpu.vector_store %arg4[%c0_16, %c0_17, %c0_18, %c0_19], %33 {strides = array<i32>} : memref<1x4x2x128xf32, #tpu.memory_space<vmem>>, vector<1x1x2x128xf32>,
    %c0_20 = arith.constant 0 : index
    %c1 = arith.constant 1 : index
    %c0_21 = arith.constant 0 : index
    %c0_22 = arith.constant 0 : index
    %34 = vector.load %arg4[%c0_20, %c1, %c0_21, %c0_22] : memref<1x4x2x128xf32, #tpu.memory_space<vmem>>, vector<1x1x2x128xf32>
    %35 = vector.shape_cast %34 : vector<1x1x2x128xf32> to vector<2x128xf32>
    %36 = arith.mulf %26, %4 : vector<2x8x128xf32>
    %cst_23 = arith.constant dense<0.000000e+00> : vector<2x128xf32>
    %37 = vector.multi_reduction <add>, %36, %cst_23 [1] : vector<2x8x128xf32> to vector<2x128xf32>
    %38 = arith.addf %35, %37 : vector<2x128xf32>
    %c0_24 = arith.constant 0 : index
    %c1_25 = arith.constant 1 : index
    %c0_26 = arith.constant 0 : index
    %c0_27 = arith.constant 0 : index
    %39 = vector.load %arg4[%c0_24, %c1_25, %c0_26, %c0_27] : memref<1x4x2x128xf32, #tpu.memory_space<vmem>>, vector<1x1x2x128xf32>
    %40 = vector.shape_cast %39 : vector<1x1x2x128xf32> to vector<2x128xf32>
    %41 = vector.shape_cast %38 : vector<2x128xf32> to vector<1x1x2x128xf32>
    tpu.vector_store %arg4[%c0_24, %c1_25, %c0_26, %c0_27], %41 {strides = array<i32>} : memref<1x4x2x128xf32, #tpu.memory_space<vmem>>, vector<1x1x2x128xf32>,
    %c0_28 = arith.constant 0 : index
    %c2 = arith.constant 2 : index
    %c0_29 = arith.constant 0 : index
    %c0_30 = arith.constant 0 : index
    %42 = vector.load %arg4[%c0_28, %c2, %c0_29, %c0_30] : memref<1x4x2x128xf32, #tpu.memory_space<vmem>>, vector<1x1x2x128xf32>
    %43 = vector.shape_cast %42 : vector<1x1x2x128xf32> to vector<2x128xf32>
    %cst_31 = arith.constant dense<0.000000e+00> : vector<2x128xf32>
    %44 = vector.multi_reduction <add>, %26, %cst_31 [1] : vector<2x8x128xf32> to vector<2x128xf32>
    %45 = arith.addf %43, %44 : vector<2x128xf32>
    %c0_32 = arith.constant 0 : index
    %c2_33 = arith.constant 2 : index
    %c0_34 = arith.constant 0 : index
    %c0_35 = arith.constant 0 : index
    %46 = vector.load %arg4[%c0_32, %c2_33, %c0_34, %c0_35] : memref<1x4x2x128xf32, #tpu.memory_space<vmem>>, vector<1x1x2x128xf32>
    %47 = vector.shape_cast %46 : vector<1x1x2x128xf32> to vector<2x128xf32>
    %48 = vector.shape_cast %45 : vector<2x128xf32> to vector<1x1x2x128xf32>
    tpu.vector_store %arg4[%c0_32, %c2_33, %c0_34, %c0_35], %48 {strides = array<i32>} : memref<1x4x2x128xf32, #tpu.memory_space<vmem>>, vector<1x1x2x128xf32>,
    %c0_36 = arith.constant 0 : index
    %c3 = arith.constant 3 : index
    %c0_37 = arith.constant 0 : index
    %c0_38 = arith.constant 0 : index
    %49 = vector.load %arg4[%c0_36, %c3, %c0_37, %c0_38] : memref<1x4x2x128xf32, #tpu.memory_space<vmem>>, vector<1x1x2x128xf32>
    %50 = vector.shape_cast %49 : vector<1x1x2x128xf32> to vector<2x128xf32>
    %cst_39 = arith.constant dense<0.000000e+00> : vector<2x128xf32>
    %51 = vector.multi_reduction <add>, %4, %cst_39 [1] : vector<2x8x128xf32> to vector<2x128xf32>
    %52 = arith.addf %50, %51 : vector<2x128xf32>
    %c0_40 = arith.constant 0 : index
    %c3_41 = arith.constant 3 : index
    %c0_42 = arith.constant 0 : index
    %c0_43 = arith.constant 0 : index
    %53 = vector.load %arg4[%c0_40, %c3_41, %c0_42, %c0_43] : memref<1x4x2x128xf32, #tpu.memory_space<vmem>>, vector<1x1x2x128xf32>
    %54 = vector.shape_cast %53 : vector<1x1x2x128xf32> to vector<2x128xf32>
    %55 = vector.shape_cast %52 : vector<2x128xf32> to vector<1x1x2x128xf32>
    tpu.vector_store %arg4[%c0_40, %c3_41, %c0_42, %c0_43], %55 {strides = array<i32>} : memref<1x4x2x128xf32, #tpu.memory_space<vmem>>, vector<1x1x2x128xf32>,
    return
  }
  func.func @transform_0(%arg0: i32, %arg1: i32) -> (i32, i32, i32) {
    %c1_i32 = arith.constant 1 : i32
    %0 = arith.muli %arg0, %c1_i32 : i32
    %1 = arith.addi %0, %arg1 : i32
    %c0_i32 = arith.constant 0 : i32
    %c0_i32_0 = arith.constant 0 : i32
    %c0_i32_1 = arith.constant 0 : i32
    return %c0_i32, %1, %c0_i32_0 : i32, i32, i32
  }
  func.func @transform_1(%arg0: i32, %arg1: i32) -> (i32, i32, i32) {
    %c1_i32 = arith.constant 1 : i32
    %0 = arith.muli %arg0, %c1_i32 : i32
    %1 = arith.addi %0, %arg1 : i32
    %c0_i32 = arith.constant 0 : i32
    %c0_i32_0 = arith.constant 0 : i32
    %c0_i32_1 = arith.constant 0 : i32
    return %c0_i32, %1, %c0_i32_0 : i32, i32, i32
  }
  func.func @transform_2(%arg0: i32, %arg1: i32) -> (i32, i32, i32, i32) {
    %c0_i32 = arith.constant 0 : i32
    %c0_i32_0 = arith.constant 0 : i32
    %c0_i32_1 = arith.constant 0 : i32
    %c0_i32_2 = arith.constant 0 : i32
    return %arg0, %c0_i32, %c0_i32_0, %c0_i32_1 : i32, i32, i32, i32
  }
}

</mosaic_0001>

<llo_original>
// kernel: tpu_custom_call.1
$region0: #{tpu_custom_call.1}
  #allocation0 [shape = 'u32[]', space=smem, size = 0x4, offset = 0x4, fixed_abs, tag = 'smem constant byte address 0x4 - core index']
  #allocation1 [shape = 'u32[144,128]{1,0:T(1,128)}', space=vmem, size = 0x12000, scoped, tag = 'internal scratch']
  %s0 = inlined_call_operand.hbm [shape: f32[2,8,128], index: 0, kind: input, shape index: {}]
  %s1 = inlined_call_operand.hbm [shape: f32[2,8,128], index: 1, kind: input, shape index: {}]
  %s2 = inlined_call_operand.hbm [shape: f32[1,4,2,128], index: 2, kind: output, shape index: {}]
  %s3 = sld [smem:[#allocation0]]
  $region30: #{tpu_custom_call.1} parent=0
    _
  %s5 = ssub.s32 1, %s3
  %s6 = scalar_select 0, %s5, %s3
  $region1: #{tpu_custom_call.1} parent=0
    #allocation2 [shape = 'u8[8192]{0}', space=vmem, size = 0x2000, scoped, tag = 'input window, operand 0, single buffered']
    #allocation3 [shape = 's32[1]{0}', space=sflag, size = 0x4, scoped, tag = 'scoped memory for tpu_custom_call.1']
    #allocation4 [shape = 's32[1]{0}', space=sflag, size = 0x4, scoped, tag = 'scoped memory for tpu_custom_call.1']
    #allocation5 [shape = 'u8[8192]{0}', space=vmem, size = 0x2000, scoped, tag = 'input window, operand 1, single buffered']
    #allocation6 [shape = 's32[1]{0}', space=sflag, size = 0x4, scoped, tag = 'scoped memory for tpu_custom_call.1']
    #allocation7 [shape = 'u8[4096]{0}', space=vmem, size = 0x1000, scoped, tag = 'output window, operand 0, single buffered']
    %7 = vsyncpa [#allocation3], 0
    %8 = vsyncpa [#allocation6], 0
    %9 = vsyncpa [#allocation4], 0
    // Predicated region
    $region2: #{tpu_custom_call.1} parent=1 // pred_check
      _
    $region3: #{tpu_custom_call.1} parent=1 // pred_check_branch
      %11 = sbr.rel (0) target = $region5
    $region4: #{tpu_custom_call.1} parent=1 // pred_region
      %s12 = sadd.s32 0, 0
      %s14 = ssub.s32 256, 256
      %15 = vsyncadd [#allocation3], %s14
      %s16 = smul.addr %s12, 128
      %s17 = scalar_lea.hbm %s0, %s16
      %s18 = sshll.u32 [#allocation2], 4
      %s19 = int_to_ptr.vmem [resolvable:$true] %s18
      %24 = dma.hbm_to_vmem [thread:$0]  %s17, 256, %s19, [#allocation3], 128, 128, 8
    $region5: #{tpu_custom_call.1} parent=1 // pred_fallthru
      _
    // Predicated region
    $region6: #{tpu_custom_call.1} parent=1 // pred_check
      _
    $region7: #{tpu_custom_call.1} parent=1 // pred_check_branch
      %26 = sbr.rel (0) target = $region9
    $region8: #{tpu_custom_call.1} parent=1 // pred_region
      %s27 = sadd.s32 0, 0
      %s29 = ssub.s32 256, 256
      %30 = vsyncadd [#allocation6], %s29
      %s31 = smul.addr %s27, 128
      %s32 = scalar_lea.hbm %s1, %s31
      %s33 = sshll.u32 [#allocation5], 4
      %s34 = int_to_ptr.vmem [resolvable:$true] %s33
      %39 = dma.hbm_to_vmem [thread:$0]  %s32, 256, %s34, [#allocation6], 128, 128, 8
    $region9: #{tpu_custom_call.1} parent=1 // pred_fallthru
      _
    // Predicated region
    $region10: #{tpu_custom_call.1} parent=1 // pred_check
      _
    $region11: #{tpu_custom_call.1} parent=1 // pred_check_branch
      %41 = sbr.rel (0) target = $region13
    $region12: #{tpu_custom_call.1} parent=1 // pred_region
      %42 = dma.done [#allocation3], 256
    $region13: #{tpu_custom_call.1} parent=1 // pred_fallthru
      _
    // Predicated region
    $region14: #{tpu_custom_call.1} parent=1 // pred_check
      _
    $region15: #{tpu_custom_call.1} parent=1 // pred_check_branch
      %44 = sbr.rel (0) target = $region17
    $region16: #{tpu_custom_call.1} parent=1 // pred_region
      %45 = dma.done [#allocation6], 256
    $region17: #{tpu_custom_call.1} parent=1 // pred_fallthru
      _
    %s46 = sadd.s32 0, 0
    %s47 = sadd.s32 0, 0
    %p48 = scmp.eq.s32.totalorder 0, 0
    // Predicated region
    $region18: #{tpu_custom_call.1} parent=1 // pred_check
      %p49 = pneg %p48
    $region19: #{tpu_custom_call.1} parent=1 // pred_check_branch
      %51 = sbr.rel (%p49) target = $region21
    $region20: #{tpu_custom_call.1} parent=1 // pred_region
      %52 = vst [vmem:[#allocation7] sm:$0x3] 0.0
      %53 = vst [vmem:[#allocation7 + $0x2] sm:$0x3] 0.0
      %54 = vst [vmem:[#allocation7 + $0x4] sm:$0x3] 0.0
      %55 = vst [vmem:[#allocation7 + $0x6] sm:$0x3] 0.0
    $region21: #{tpu_custom_call.1} parent=1 // pred_fallthru
      _
    %v56 = vld [vmem:[#allocation2] sm:$0xff]
    %v57 = vld [vmem:[#allocation2 + $0x8] sm:$0xff]
    %v58 = vld [vmem:[#allocation5] sm:$0xff]
    %v59 = vld [vmem:[#allocation5 + $0x8] sm:$0xff]
    %v60 = vand.u32 2147483647, %v56
    %v61 = vand.u32 2147483647, %v57
    %v62 = vsub.f32 0.0, %v60
    %v63 = vsub.f32 0.0, %v61
    %v64 = vmul.f32 %v62, 1.442695
    %v65 = vpow.pop %v64
    %v66 = vmul.f32 %v63, 1.442695
    %v67 = vpow.pop %v66
    %v68 = vmax.f32 %v56, 0.0
    %v69 = vmax.f32 %v57, 0.0
    %v70 = vmul.f32 %v56, %v58
    %v71 = vmul.f32 %v57, %v59
    %v72 = vsub.f32 %v68, %v70
    %v73 = vsub.f32 %v69, %v71
    %v74 = vadd.f32 %v65, 1.0
    %v75 = vlog2.pop %v74
    %v76 = vmul.f32 %v75, 0.6931472
    %v77 = vmul.f32 -0.5, %v65
    %v78 = vadd.f32 %v77, 1.0
    %v79 = vmul.f32 %v78, %v65
    %v80 = vand.u32 2147483647, %v65
    %vm81 = vcmp.lt.f32.partialorder %v80, 0.0004427343
    %v82 = vsel %vm81, %v79, %v76
    %v83 = vadd.f32 %v67, 1.0
    %v84 = vlog2.pop %v83
    %v85 = vmul.f32 %v84, 0.6931472
    %v86 = vmul.f32 -0.5, %v67
    %v87 = vadd.f32 %v86, 1.0
    %v88 = vmul.f32 %v87, %v67
    %v89 = vand.u32 2147483647, %v67
    %vm90 = vcmp.lt.f32.partialorder %v89, 0.0004427343
    %v91 = vsel %vm90, %v88, %v85
    %v92 = vadd.f32 %v72, %v82
    %v93 = vadd.f32 %v73, %v91
    %v94 = vadd.f32 %v65, 1.0
    %v95 = vadd.f32 %v67, 1.0
    %v96 = vrcp.pop %v94
    %v97 = vrcp.pop %v95
    %v98 = vmul.f32 %v94, %v96
    %v99 = vmul.f32 %v95, %v97
    %v100 = vsub.f32 2.0, %v98
    %v101 = vsub.f32 2.0, %v99
    %v102 = vmul.f32 %v96, %v100
    %v103 = vmul.f32 %v97, %v101
    %vm104 = vcmp.ge.f32.partialorder %v56, 0.0
    %vm105 = vcmp.ge.f32.partialorder %v57, 0.0
    %v106 = vsel %vm104, 1.0, %v65
    %v107 = vsel %vm105, 1.0, %v67
    %v108 = vmul.f32 %v106, %v102
    %v109 = vmul.f32 %v107, %v103
    %v110 = vld [vmem:[#allocation7] sm:$0x3]
    %v111 = vrot.slane %v92, 4
    %v112 = vadd.f32 %v92, %v111
    %v113 = vrot.slane %v112, 2
    %v114 = vadd.f32 %v112, %v113
    %v115 = vrot.slane %v114, 1
    %v116 = vadd.f32 %v114, %v115
    %v117 = vrot.slane %v93, 4
    %v118 = vadd.f32 %v93, %v117
    %v119 = vrot.slane %v118, 2
    %v120 = vadd.f32 %v118, %v119
    %v121 = vrot.slane %v120, 1
    %v122 = vadd.f32 %v120, %v121
    %vm125 = vcmask 1041409
    %v126 = vsel %vm125, %v122, %v116
    %v128 = vadd.f32 %v110, %v126
    %129 = vst [vmem:[#allocation7] sm:$0x3] %v128
    %s130 = scalar_lea.vmem [#allocation7], 2
    %v131 = vld [vmem:[%s130] sm:$0x3]
    %v132 = vmul.f32 %v108, %v58
    %v133 = vmul.f32 %v109, %v59
    %v134 = vrot.slane %v132, 4
    %v135 = vadd.f32 %v132, %v134
    %v136 = vrot.slane %v135, 2
    %v137 = vadd.f32 %v135, %v136
    %v138 = vrot.slane %v137, 1
    %v139 = vadd.f32 %v137, %v138
    %v140 = vrot.slane %v133, 4
    %v141 = vadd.f32 %v133, %v140
    %v142 = vrot.slane %v141, 2
    %v143 = vadd.f32 %v141, %v142
    %v144 = vrot.slane %v143, 1
    %v145 = vadd.f32 %v143, %v144
    %v148 = vsel %vm125, %v145, %v139
    %v150 = vadd.f32 %v131, %v148
    %151 = vst [vmem:[%s130] sm:$0x3] %v150
    %s152 = scalar_lea.vmem [#allocation7], 4
    %v153 = vld [vmem:[%s152] sm:$0x3]
    %v154 = vrot.slane %v108, 4
    %v155 = vadd.f32 %v108, %v154
    %v156 = vrot.slane %v155, 2
    %v157 = vadd.f32 %v155, %v156
    %v158 = vrot.slane %v157, 1
    %v159 = vadd.f32 %v157, %v158
    %v160 = vrot.slane %v109, 4
    %v161 = vadd.f32 %v109, %v160
    %v162 = vrot.slane %v161, 2
    %v163 = vadd.f32 %v161, %v162
    %v164 = vrot.slane %v163, 1
    %v165 = vadd.f32 %v163, %v164
    %v168 = vsel %vm125, %v165, %v159
    %v170 = vadd.f32 %v153, %v168
    %171 = vst [vmem:[%s152] sm:$0x3] %v170
    %s172 = scalar_lea.vmem [#allocation7], 6
    %v173 = vld [vmem:[%s172] sm:$0x3]
    %v174 = vrot.slane %v58, 4
    %v175 = vadd.f32 %v58, %v174
    %v176 = vrot.slane %v175, 2
    %v177 = vadd.f32 %v175, %v176
    %v178 = vrot.slane %v177, 1
    %v179 = vadd.f32 %v177, %v178
    %v180 = vrot.slane %v59, 4
    %v181 = vadd.f32 %v59, %v180
    %v182 = vrot.slane %v181, 2
    %v183 = vadd.f32 %v181, %v182
    %v184 = vrot.slane %v183, 1
    %v185 = vadd.f32 %v183, %v184
    %v188 = vsel %vm125, %v185, %v179
    %v190 = vadd.f32 %v173, %v188
    %191 = vst [vmem:[%s172] sm:$0x3] %v190
    // Predicated region
    $region22: #{tpu_custom_call.1} parent=1 // pred_check
      _
    $region23: #{tpu_custom_call.1} parent=1 // pred_check_branch
      %193 = sbr.rel (0) target = $region25
    $region24: #{tpu_custom_call.1} parent=1 // pred_region
      %s195 = ssub.s32 128, 128
      %196 = vsyncadd [#allocation4], %s195
      %s197 = sshll.u32 [#allocation7], 4
      %s198 = int_to_ptr.vmem [resolvable:$true] %s197
      %203 = dma.vmem_to_hbm [thread:$0]  %s198, 128, %s2, [#allocation4], 32, 32, 2
    $region25: #{tpu_custom_call.1} parent=1 // pred_fallthru
      _
    // Predicated region
    $region26: #{tpu_custom_call.1} parent=1 // pred_check
      _
    $region27: #{tpu_custom_call.1} parent=1 // pred_check_branch
      %205 = sbr.rel (0) target = $region29
    $region28: #{tpu_custom_call.1} parent=1 // pred_region
      %206 = dma.done [#allocation4], 128
    $region29: #{tpu_custom_call.1} parent=1 // pred_fallthru
      _
    %207 = vsyncpa [#allocation3], 1
    %208 = vsyncpa [#allocation6], 1
    %209 = vsyncpa [#allocation4], 1

</llo_original>
